<compile_context>
chip_gen: v6e
topology: v6e:2x2x1
jax: 0.10.0
libtpu: 0.0.40
codegen_flags: <defaults>
</compile_context>

<pallas_src>
import functools

import jax
import jax.numpy as jnp
import numpy as np
from jax.experimental import pallas as pl
from jax.experimental.pallas import tpu as pltpu


def _gelu_exact(x):
    """Exact GELU: 0.5*x*(1+erf(x/sqrt(2))).

    erf is evaluated with the Abramowitz & Stegun 7.1.26 rational approximation
    (max abs error ~1.5e-7) so the kernel only needs exp / mul / add / select,
    all of which lower cleanly in Mosaic.
    """
    z = x * jnp.float32(0.7071067811865476)          # x / sqrt(2)
    a = jnp.abs(z)
    t = 1.0 / (1.0 + jnp.float32(0.3275911) * a)
    poly = t * (jnp.float32(0.254829592)
          + t * (jnp.float32(-0.284496736)
          + t * (jnp.float32(1.421413741)
          + t * (jnp.float32(-1.453152027)
          + t * jnp.float32(1.061405429)))))
    erf_abs = 1.0 - poly * jnp.exp(-a * a)
    erf = jnp.where(z >= 0, erf_abs, -erf_abs)
    return jnp.float32(0.5) * x * (1.0 + erf)


def _ffn_kernel(x_ref, w1_ref, b1_ref, w2_ref, b2_ref, o_ref):
    # x_ref: (row_block, D) tile of the batch-flattened input.
    x = x_ref[...]                                                     # (M, D)

    # First Linear (bias) + exact GELU, f32 accumulation on the MXU.
    h = jnp.dot(x, w1_ref[...], preferred_element_type=jnp.float32)   # (M, H)
    h = h + b1_ref[...]                                                # (1, H) broadcast
    h = _gelu_exact(h)
    # Dropout(p=0.0) -> identity.

    # Second Linear (bias).
    y = jnp.dot(h, w2_ref[...], preferred_element_type=jnp.float32)   # (M, D)
    y = y + b2_ref[...]
    # Dropout(p=0.0) -> identity.

    o_ref[...] = y.astype(o_ref.dtype)


def feedforward_pallas(x, w1, b1, w2, b2, *, row_block=None):
    """y = GELU(x @ W1 + b1) @ W2 + b2, fused in one Pallas kernel.

    x : (B, N, D); w1 : (D, H); b1 : (1, H); w2 : (H, D); b2 : (1, D)
    """
    B, N, D = x.shape
    H = w1.shape[1]
    assert w1.shape == (D, H)
    assert b1.shape == (1, H)
    assert w2.shape == (H, D)
    assert b2.shape == (1, D)

    M = B * N
    # Collapse the batch/seq dims: one kernel invocation handles all rows.
    if row_block is None:
        row_block = M
    assert M % row_block == 0
    grid = (M // row_block,)

    x2 = x.reshape(M, D)

    out = pl.pallas_call(
        _ffn_kernel,
        out_shape=jax.ShapeDtypeStruct((M, D), x.dtype),
        grid=grid,
        in_specs=[
            pl.BlockSpec((row_block, D), lambda i: (i, 0)),   # x rows (tiled)
            pl.BlockSpec((D, H), lambda i: (0, 0)),           # W1 (whole)
            pl.BlockSpec((1, H), lambda i: (0, 0)),           # b1 (whole)
            pl.BlockSpec((H, D), lambda i: (0, 0)),           # W2 (whole)
            pl.BlockSpec((1, D), lambda i: (0, 0)),           # b2 (whole)
        ],
        out_specs=pl.BlockSpec((row_block, D), lambda i: (i, 0)),
        compiler_params=pltpu.CompilerParams(
            dimension_semantics=("parallel",)),               # row blocks are independent
    )(x2, w1, b1, w2, b2)

    return out.reshape(B, N, D)


def feedforward_ref(x, w1, b1, w2, b2):
    """Pure-JAX reference mirroring the PyTorch forward (exact GELU)."""
    h = jnp.einsum('bnd,dh->bnh', x, w1) + b1[0]
    h = jax.nn.gelu(h, approximate=False)     # nn.GELU() default = exact erf GELU
    return jnp.einsum('bnh,hd->bnd', h, w2) + b2[0]


if __name__ == "__main__":
    # Small shapes consistent with the module: dim=32, hidden_dim=128 (4x),
    # batch=2, seq=8.
    B, N, D, H = 2, 8, 32, 128

    key = jax.random.PRNGKey(0)
    kx, kw1, kb1, kw2, kb2 = jax.random.split(key, 5)
    x = jax.random.normal(kx, (B, N, D), dtype=jnp.float32)
    w1 = jax.random.normal(kw1, (D, H), dtype=jnp.float32) * 0.05
    b1 = jax.random.normal(kb1, (1, H), dtype=jnp.float32) * 0.05
    w2 = jax.random.normal(kw2, (H, D), dtype=jnp.float32) * 0.05
    b2 = jax.random.normal(kb2, (1, D), dtype=jnp.float32) * 0.05

    y = feedforward_pallas(x, w1, b1, w2, b2)
    y = jax.block_until_ready(y)

    y_ref = feedforward_ref(x, w1, b1, w2, b2)
    np.testing.assert_allclose(np.asarray(y), np.asarray(y_ref),
                               rtol=1e-4, atol=1e-4)
    print("KERNEL_OK")
</pallas_src>

<mosaic_0001>
module attributes {stable_mosaic.version = 11 : i64} {
  func.func @_ffn_kernel(%arg0: i32, %arg1: memref<16x32xf32, #tpu.memory_space<vmem>>, %arg2: memref<32x128xf32, #tpu.memory_space<vmem>>, %arg3: memref<1x128xf32, #tpu.memory_space<vmem>>, %arg4: memref<128x32xf32, #tpu.memory_space<vmem>>, %arg5: memref<1x32xf32, #tpu.memory_space<vmem>>, %arg6: memref<16x32xf32, #tpu.memory_space<vmem>>) attributes {dimension_semantics = [#tpu.dimension_semantics<parallel>], iteration_bounds = array<i64: 1>, scalar_prefetch = 0 : i64, scratch_operands = 0 : i64, tpu.core_type = #tpu.core_type<tc>, window_params = [{transform_indices = @transform_0, window_bounds = array<i64: 16, 32>}, {pipeline_mode = #tpu.pipeline_mode<synchronous>, transform_indices = @transform_1, window_bounds = array<i64: 32, 128>}, {pipeline_mode = #tpu.pipeline_mode<synchronous>, transform_indices = @transform_2, window_bounds = array<i64: 1, 128>}, {pipeline_mode = #tpu.pipeline_mode<synchronous>, transform_indices = @transform_3, window_bounds = array<i64: 128, 32>}, {pipeline_mode = #tpu.pipeline_mode<synchronous>, transform_indices = @transform_4, window_bounds = array<i64: 1, 32>}, {transform_indices = @transform_5, window_bounds = array<i64: 16, 32>}]} {
    %c0 = arith.constant 0 : index
    %c0_0 = arith.constant 0 : index
    %0 = vector.load %arg1[%c0, %c0_0] : memref<16x32xf32, #tpu.memory_space<vmem>>, vector<16x32xf32>
    %c0_1 = arith.constant 0 : index
    %c0_2 = arith.constant 0 : index
    %1 = vector.load %arg2[%c0_1, %c0_2] : memref<32x128xf32, #tpu.memory_space<vmem>>, vector<32x128xf32>
    %cst = arith.constant dense<0.000000e+00> : vector<16x128xf32>
    %2 = tpu.matmul %0, %1, %cst {dimension_numbers = #tpu.dot_dimension_numbers<[1], [0], [0], [1], [0, 0, 1, 1], [], []>} : vector<16x32xf32>, vector<32x128xf32>, vector<16x128xf32> -> vector<16x128xf32>
    %c0_3 = arith.constant 0 : index
    %c0_4 = arith.constant 0 : index
    %3 = vector.load %arg3[%c0_3, %c0_4] : memref<1x128xf32, #tpu.memory_space<vmem>>, vector<1x128xf32>
    %4 = vector.broadcast %3 : vector<1x128xf32> to vector<16x128xf32>
    %5 = arith.addf %2, %4 : vector<16x128xf32>
    %cst_5 = arith.constant 0.707106769 : f32
    %6 = vector.broadcast %cst_5 : f32 to vector<16x128xf32>
    %7 = arith.mulf %5, %6 : vector<16x128xf32>
    %8 = math.absf %7 : vector<16x128xf32>
    %cst_6 = arith.constant 0.327591091 : f32
    %9 = vector.broadcast %cst_6 : f32 to vector<16x128xf32>
    %10 = arith.mulf %9, %8 : vector<16x128xf32>
    %cst_7 = arith.constant 1.000000e+00 : f32
    %11 = vector.broadcast %cst_7 : f32 to vector<16x128xf32>
    %12 = arith.addf %11, %10 : vector<16x128xf32>
    %cst_8 = arith.constant 1.000000e+00 : f32
    %13 = vector.broadcast %cst_8 : f32 to vector<16x128xf32>
    %14 = arith.divf %13, %12 : vector<16x128xf32>
    %cst_9 = arith.constant 1.06140542 : f32
    %15 = vector.broadcast %cst_9 : f32 to vector<16x128xf32>
    %16 = arith.mulf %14, %15 : vector<16x128xf32>
    %cst_10 = arith.constant -1.45315206 : f32
    %17 = vector.broadcast %cst_10 : f32 to vector<16x128xf32>
    %18 = arith.addf %17, %16 : vector<16x128xf32>
    %19 = arith.mulf %14, %18 : vector<16x128xf32>
    %cst_11 = arith.constant 1.42141378 : f32
    %20 = vector.broadcast %cst_11 : f32 to vector<16x128xf32>
    %21 = arith.addf %20, %19 : vector<16x128xf32>
    %22 = arith.mulf %14, %21 : vector<16x128xf32>
    %cst_12 = arith.constant -0.284496725 : f32
    %23 = vector.broadcast %cst_12 : f32 to vector<16x128xf32>
    %24 = arith.addf %23, %22 : vector<16x128xf32>
    %25 = arith.mulf %14, %24 : vector<16x128xf32>
    %cst_13 = arith.constant 0.254829586 : f32
    %26 = vector.broadcast %cst_13 : f32 to vector<16x128xf32>
    %27 = arith.addf %26, %25 : vector<16x128xf32>
    %28 = arith.mulf %14, %27 : vector<16x128xf32>
    %cst_14 = arith.constant 0.000000e+00 : f32
    %29 = vector.broadcast %cst_14 : f32 to vector<16x128xf32>
    %30 = arith.subf %29, %8 : vector<16x128xf32>
    %31 = arith.mulf %30, %8 : vector<16x128xf32>
    %32 = math.exp %31 : vector<16x128xf32>
    %33 = arith.mulf %28, %32 : vector<16x128xf32>
    %cst_15 = arith.constant 1.000000e+00 : f32
    %34 = vector.broadcast %cst_15 : f32 to vector<16x128xf32>
    %35 = arith.subf %34, %33 : vector<16x128xf32>
    %cst_16 = arith.constant 0.000000e+00 : f32
    %36 = vector.broadcast %cst_16 : f32 to vector<16x128xf32>
    %37 = arith.cmpf oge, %7, %36 : vector<16x128xf32>
    %cst_17 = arith.constant 0.000000e+00 : f32
    %38 = vector.broadcast %cst_17 : f32 to vector<16x128xf32>
    %39 = arith.subf %38, %35 : vector<16x128xf32>
    %40 = arith.select %37, %35, %39 : vector<16x128xi1>, vector<16x128xf32>
    %cst_18 = arith.constant 5.000000e-01 : f32
    %41 = vector.broadcast %cst_18 : f32 to vector<16x128xf32>
    %42 = arith.mulf %41, %5 : vector<16x128xf32>
    %cst_19 = arith.constant 1.000000e+00 : f32
    %43 = vector.broadcast %cst_19 : f32 to vector<16x128xf32>
    %44 = arith.addf %43, %40 : vector<16x128xf32>
    %45 = arith.mulf %42, %44 : vector<16x128xf32>
    %c0_20 = arith.constant 0 : index
    %c0_21 = arith.constant 0 : index
    %46 = vector.load %arg4[%c0_20, %c0_21] : memref<128x32xf32, #tpu.memory_space<vmem>>, vector<128x32xf32>
    %cst_22 = arith.constant dense<0.000000e+00> : vector<16x32xf32>
    %47 = tpu.matmul %45, %46, %cst_22 {dimension_numbers = #tpu.dot_dimension_numbers<[1], [0], [0], [1], [0, 0, 1, 1], [], []>} : vector<16x128xf32>, vector<128x32xf32>, vector<16x32xf32> -> vector<16x32xf32>
    %c0_23 = arith.constant 0 : index
    %c0_24 = arith.constant 0 : index
    %48 = vector.load %arg5[%c0_23, %c0_24] : memref<1x32xf32, #tpu.memory_space<vmem>>, vector<1x32xf32>
    %49 = vector.broadcast %48 : vector<1x32xf32> to vector<16x32xf32>
    %50 = arith.addf %47, %49 : vector<16x32xf32>
    %c0_25 = arith.constant 0 : index
    %c0_26 = arith.constant 0 : index
    %51 = vector.load %arg6[%c0_25, %c0_26] : memref<16x32xf32, #tpu.memory_space<vmem>>, vector<16x32xf32>
    tpu.vector_store %arg6[%c0_25, %c0_26], %50 {strides = array<i32>} : memref<16x32xf32, #tpu.memory_space<vmem>>, vector<16x32xf32>,
    return
  }
  func.func @transform_0(%arg0: i32) -> (i32, i32) {
    %c0_i32 = arith.constant 0 : i32
    %c0_i32_0 = arith.constant 0 : i32
    return %arg0, %c0_i32 : i32, i32
  }
  func.func @transform_1(%arg0: i32) -> (i32, i32) {
    %c0_i32 = arith.constant 0 : i32
    %c0_i32_0 = arith.constant 0 : i32
    %c0_i32_1 = arith.constant 0 : i32
    return %c0_i32, %c0_i32_0 : i32, i32
  }
  func.func @transform_2(%arg0: i32) -> (i32, i32) {
    %c0_i32 = arith.constant 0 : i32
    %c0_i32_0 = arith.constant 0 : i32
    %c0_i32_1 = arith.constant 0 : i32
    return %c0_i32, %c0_i32_0 : i32, i32
  }
  func.func @transform_3(%arg0: i32) -> (i32, i32) {
    %c0_i32 = arith.constant 0 : i32
    %c0_i32_0 = arith.constant 0 : i32
    %c0_i32_1 = arith.constant 0 : i32
    return %c0_i32, %c0_i32_0 : i32, i32
  }
  func.func @transform_4(%arg0: i32) -> (i32, i32) {
    %c0_i32 = arith.constant 0 : i32
    %c0_i32_0 = arith.constant 0 : i32
    %c0_i32_1 = arith.constant 0 : i32
    return %c0_i32, %c0_i32_0 : i32, i32
  }
  func.func @transform_5(%arg0: i32) -> (i32, i32) {
    %c0_i32 = arith.constant 0 : i32
    %c0_i32_0 = arith.constant 0 : i32
    return %arg0, %c0_i32 : i32, i32
  }
}

</mosaic_0001>

<llo_original>
// kernel: tpu_custom_call.1
$region0: #{tpu_custom_call.1}
  #allocation0 [shape = 'u32[]', space=smem, size = 0x4, offset = 0x4, fixed_abs, tag = 'smem constant byte address 0x4 - core index']
  #allocation1 [shape = 'u32[144,128]{1,0:T(1,128)}', space=vmem, size = 0x12000, scoped, tag = 'internal scratch']
  %s0 = inlined_call_operand.vmem [shape: f32[16,32], index: 0, kind: input, shape index: {}]
  %s1 = inlined_call_operand.vmem [shape: f32[32,128], index: 1, kind: input, shape index: {}]
  %s2 = inlined_call_operand.vmem [shape: f32[1,128], index: 2, kind: input, shape index: {}]
  %s3 = inlined_call_operand.vmem [shape: f32[128,32], index: 3, kind: input, shape index: {}]
  %s4 = inlined_call_operand.vmem [shape: f32[1,32], index: 4, kind: input, shape index: {}]
  %s5 = inlined_call_operand.hbm [shape: f32[16,32], index: 5, kind: output, shape index: {}]
  %s6 = sld [smem:[#allocation0]]
  $region30: #{tpu_custom_call.1} parent=0
    _
  %s8 = ssub.s32 1, %s6
  %s9 = scalar_select 0, %s8, %s6
  $region1: #{tpu_custom_call.1} parent=0
    #allocation2 [shape = 'u8[8192]{0}', space=vmem, size = 0x2000, scoped, tag = 'output window, operand 0, single buffered']
    #allocation3 [shape = 's32[1]{0}', space=sflag, size = 0x4, scoped, tag = 'scoped memory for tpu_custom_call.1']
    %10 = vsyncpa [#allocation3], 0
    // Predicated region
    $region2: #{tpu_custom_call.1} parent=1 // pred_check
      _
    $region3: #{tpu_custom_call.1} parent=1 // pred_check_branch
      %12 = sbr.rel (0) target = $region5
    $region4: #{tpu_custom_call.1} parent=1 // pred_region
      _
    $region5: #{tpu_custom_call.1} parent=1 // pred_fallthru
      _
    // Predicated region
    $region6: #{tpu_custom_call.1} parent=1 // pred_check
      _
    $region7: #{tpu_custom_call.1} parent=1 // pred_check_branch
      %14 = sbr.rel (0) target = $region9
    $region8: #{tpu_custom_call.1} parent=1 // pred_region
      _
    $region9: #{tpu_custom_call.1} parent=1 // pred_fallthru
      _
    // Predicated region
    $region10: #{tpu_custom_call.1} parent=1 // pred_check
      _
    $region11: #{tpu_custom_call.1} parent=1 // pred_check_branch
      %16 = sbr.rel (0) target = $region13
    $region12: #{tpu_custom_call.1} parent=1 // pred_region
      _
    $region13: #{tpu_custom_call.1} parent=1 // pred_fallthru
      _
    // Predicated region
    $region14: #{tpu_custom_call.1} parent=1 // pred_check
      _
    $region15: #{tpu_custom_call.1} parent=1 // pred_check_branch
      %18 = sbr.rel (0) target = $region17
    $region16: #{tpu_custom_call.1} parent=1 // pred_region
      _
    $region17: #{tpu_custom_call.1} parent=1 // pred_fallthru
      _
    // Predicated region
    $region18: #{tpu_custom_call.1} parent=1 // pred_check
      _
    $region19: #{tpu_custom_call.1} parent=1 // pred_check_branch
      %20 = sbr.rel (0) target = $region21
    $region20: #{tpu_custom_call.1} parent=1 // pred_region
      _
    $region21: #{tpu_custom_call.1} parent=1 // pred_fallthru
      _
    %v21 = vld [vmem:[%s0] sm:$0xff]
    %v22 = vld [vmem:[%s0 + $0x8] sm:$0xff]
    %v23 = vld [vmem:[%s1] sm:$0xff]
    %v24 = vld [vmem:[%s1 + $0x8] sm:$0xff]
    %v25 = vld [vmem:[%s1 + $0x10] sm:$0xff]
    %v26 = vld [vmem:[%s1 + $0x18] sm:$0xff]
    %v27 = vld [vmem:[%s2] sm:$0x1]
    %v29 = vlaneseq
    %v30 = vshrl.u32 %v29, 7
    %v31 = vsub.s32 0, %v30
    %v32 = vrot.slane %v27, %v31
    %vm34 = vcmask 261120
    %v36 = vsel %vm34, %v21, 0
    %v39 = vsel %vm34, %v22, 0
    %41 = vmatprep.subr.mxu0 0.0
    %42 = vmatpush1.msra.mxu0 0.0
    %43 = vmatprep.subr.mxu0 0.0
    %44 = vmatpush1.msra.mxu0 0.0
    %45 = vmatprep.subr.mxu0 0.0
    %46 = vmatpush1.msra.mxu0 0.0
    %47 = vmatprep.subr.mxu0 0.0
    %48 = vmatpush1.msra.mxu0 0.0
    %49 = vmatprep.subr.mxu0 0.0
    %50 = vmatpush1.msra.mxu0 0.0
    %51 = vmatprep.subr.mxu0 0.0
    %52 = vmatpush1.msra.mxu0 0.0
    %53 = vmatprep.subr.mxu0 0.0
    %54 = vmatpush1.msra.mxu0 0.0
    %55 = vmatprep.subr.mxu0 0.0
    %56 = vmatpush1.msra.mxu0 0.0
    %57 = vmatprep.subr.mxu0 0.0
    %58 = vmatpush1.msra.mxu0 0.0
    %59 = vmatprep.subr.mxu0 0.0
    %60 = vmatpush1.msra.mxu0 0.0
    %61 = vmatprep.subr.mxu0 0.0
    %62 = vmatpush1.msra.mxu0 0.0
    %63 = vmatprep.subr.mxu0 0.0
    %64 = vmatpush1.msra.mxu0 0.0
    %65 = vmatprep.subr.mxu0 0.0
    %66 = vmatpush1.msra.mxu0 %v26
    %67 = vmatprep.subr.mxu0 0.0
    %68 = vmatpush1.msra.mxu0 %v25
    %69 = vmatprep.subr.mxu0 0.0
    %70 = vmatpush1.msra.mxu0 %v24
    %71 = vmatprep.subr.mxu0 0.0
    %72 = vmatpush1.msra.mxu0 %v23
    %73 = vmatprep.subr.mxu0 0.0
    %74 = vmatpush2.msra.mxu0 0.0
    %75 = vmatprep.subr.mxu0 0.0
    %76 = vmatpush2.msra.mxu0 0.0
    %77 = vmatprep.subr.mxu0 0.0
    %78 = vmatpush2.msra.mxu0 0.0
    %79 = vmatprep.subr.mxu0 0.0
    %80 = vmatpush2.msra.mxu0 0.0
    %81 = vmatprep.subr.mxu0 0.0
    %82 = vmatpush2.msra.mxu0 0.0
    %83 = vmatprep.subr.mxu0 0.0
    %84 = vmatpush2.msra.mxu0 0.0
    %85 = vmatprep.subr.mxu0 0.0
    %86 = vmatpush2.msra.mxu0 0.0
    %87 = vmatprep.subr.mxu0 0.0
    %88 = vmatpush2.msra.mxu0 0.0
    %89 = vmatprep.subr.mxu0 0.0
    %90 = vmatpush2.msra.mxu0 0.0
    %91 = vmatprep.subr.mxu0 0.0
    %92 = vmatpush2.msra.mxu0 0.0
    %93 = vmatprep.subr.mxu0 0.0
    %94 = vmatpush2.msra.mxu0 0.0
    %95 = vmatprep.subr.mxu0 0.0
    %96 = vmatpush2.msra.mxu0 0.0
    %97 = vmatprep.subr.mxu0 0.0
    %98 = vmatpush2.msra.mxu0 0.0
    %99 = vmatprep.subr.mxu0 0.0
    %100 = vmatpush2.msra.mxu0 0.0
    %101 = vmatprep.subr.mxu0 0.0
    %102 = vmatpush2.msra.mxu0 0.0
    %103 = vmatprep.subr.mxu0 0.0
    %104 = vmatpush2.msra.mxu0 0.0
    %105 = vmatprep.mubr.f32.mxu0 0.0
    %106 = vmatmul.mubr.f32.gmra.mxu0 %v36
    %v107 = vpop.f32.mrf.mxu0
    %v108 = vadd.f32 %v32, %v107
    %v109 = vpop.f32.mrf.mxu0
    %110 = vmatprep.mubr.f32.mxu0 0.0
    %111 = vmatmul.mubr.f32.gmra.mxu0 %v39
    %v112 = vpop.f32.mrf.mxu0
    %v113 = vadd.f32 %v32, %v112
    %v114 = vpop.f32.mrf.mxu0
    %115 = vdwg.mxu0
    %v116 = vmul.f32 %v108, 0.70710677
    %v117 = vmul.f32 %v113, 0.70710677
    %v118 = vand.u32 2147483647, %v116
    %v119 = vand.u32 2147483647, %v117
    %v120 = vmul.f32 %v118, 0.3275911
    %v121 = vmul.f32 %v119, 0.3275911
    %v122 = vadd.f32 %v120, 1.0
    %v123 = vadd.f32 %v121, 1.0
    %v124 = vrcp.pop %v122
    %v125 = vmul.f32 1.0, %v124
    %v126 = vrcp.pop %v123
    %v127 = vmul.f32 1.0, %v126
    %v128 = vmul.f32 %v125, 1.0614054
    %v129 = vmul.f32 %v127, 1.0614054
    %v130 = vadd.f32 %v128, -1.4531521
    %v131 = vadd.f32 %v129, -1.4531521
    %v132 = vmul.f32 %v125, %v130
    %v133 = vmul.f32 %v127, %v131
    %v134 = vadd.f32 %v132, 1.4214138
    %v135 = vadd.f32 %v133, 1.4214138
    %v136 = vmul.f32 %v125, %v134
    %v137 = vmul.f32 %v127, %v135
    %v138 = vadd.f32 %v136, -0.28449672
    %v139 = vadd.f32 %v137, -0.28449672
    %v140 = vmul.f32 %v125, %v138
    %v141 = vmul.f32 %v127, %v139
    %v142 = vadd.f32 %v140, 0.2548296
    %v143 = vadd.f32 %v141, 0.2548296
    %v144 = vmul.f32 %v125, %v142
    %v145 = vmul.f32 %v127, %v143
    %v146 = vsub.f32 0.0, %v118
    %v147 = vsub.f32 0.0, %v119
    %v148 = vmul.f32 %v146, %v118
    %v149 = vmul.f32 %v147, %v119
    %v150 = vmul.f32 %v148, 1.442695
    %v151 = vpow.pop %v150
    %v152 = vmul.f32 %v149, 1.442695
    %v153 = vpow.pop %v152
    %v154 = vmul.f32 %v144, %v151
    %v155 = vmul.f32 %v145, %v153
    %v156 = vsub.f32 1.0, %v154
    %v157 = vsub.f32 1.0, %v155
    %vm158 = vcmp.ge.f32.partialorder %v116, 0.0
    %vm159 = vcmp.ge.f32.partialorder %v117, 0.0
    %v160 = vsub.f32 0.0, %v156
    %v161 = vsub.f32 0.0, %v157
    %v162 = vsel %vm158, %v156, %v160
    %v163 = vsel %vm159, %v157, %v161
    %v164 = vmul.f32 %v108, 0.5
    %v165 = vmul.f32 %v113, 0.5
    %v166 = vadd.f32 %v162, 1.0
    %v167 = vadd.f32 %v163, 1.0
    %v168 = vmul.f32 %v164, %v166
    %v169 = vmul.f32 %v165, %v167
    %v170 = vld [vmem:[%s3] sm:$0xff]
    %v171 = vld [vmem:[%s3 + $0x8] sm:$0xff]
    %v172 = vld [vmem:[%s3 + $0x10] sm:$0xff]
    %v173 = vld [vmem:[%s3 + $0x18] sm:$0xff]
    %v174 = vld [vmem:[%s3 + $0x20] sm:$0xff]
    %v175 = vld [vmem:[%s3 + $0x28] sm:$0xff]
    %v176 = vld [vmem:[%s3 + $0x30] sm:$0xff]
    %v177 = vld [vmem:[%s3 + $0x38] sm:$0xff]
    %v178 = vld [vmem:[%s3 + $0x40] sm:$0xff]
    %v179 = vld [vmem:[%s3 + $0x48] sm:$0xff]
    %v180 = vld [vmem:[%s3 + $0x50] sm:$0xff]
    %v181 = vld [vmem:[%s3 + $0x58] sm:$0xff]
    %v182 = vld [vmem:[%s3 + $0x60] sm:$0xff]
    %v183 = vld [vmem:[%s3 + $0x68] sm:$0xff]
    %v184 = vld [vmem:[%s3 + $0x70] sm:$0xff]
    %v185 = vld [vmem:[%s3 + $0x78] sm:$0xff]
    %v186 = vld [vmem:[%s4] sm:$0x1]
    %v188 = vlaneseq
    %v189 = vshrl.u32 %v188, 7
    %v190 = vsub.s32 0, %v189
    %v191 = vrot.slane %v186, %v190
    %193 = vmatprep.subr.mxu0 0.0
    %194 = vmatpush1.msra.mxu0 %v185
    %195 = vmatprep.subr.mxu0 0.0
    %196 = vmatpush1.msra.mxu0 %v184
    %197 = vmatprep.subr.mxu0 0.0
    %198 = vmatpush1.msra.mxu0 %v183
    %199 = vmatprep.subr.mxu0 0.0
    %200 = vmatpush1.msra.mxu0 %v182
    %201 = vmatprep.subr.mxu0 0.0
    %202 = vmatpush1.msra.mxu0 %v181
    %203 = vmatprep.subr.mxu0 0.0
    %204 = vmatpush1.msra.mxu0 %v180
    %205 = vmatprep.subr.mxu0 0.0
    %206 = vmatpush1.msra.mxu0 %v179
    %207 = vmatprep.subr.mxu0 0.0
    %208 = vmatpush1.msra.mxu0 %v178
    %209 = vmatprep.subr.mxu0 0.0
    %210 = vmatpush1.msra.mxu0 %v177
    %211 = vmatprep.subr.mxu0 0.0
    %212 = vmatpush1.msra.mxu0 %v176
    %213 = vmatprep.subr.mxu0 0.0
    %214 = vmatpush1.msra.mxu0 %v175
    %215 = vmatprep.subr.mxu0 0.0
    %216 = vmatpush1.msra.mxu0 %v174
    %217 = vmatprep.subr.mxu0 0.0
    %218 = vmatpush1.msra.mxu0 %v173
    %219 = vmatprep.subr.mxu0 0.0
    %220 = vmatpush1.msra.mxu0 %v172
    %221 = vmatprep.subr.mxu0 0.0
    %222 = vmatpush1.msra.mxu0 %v171
    %223 = vmatprep.subr.mxu0 0.0
    %224 = vmatpush1.msra.mxu0 %v170
    %225 = vmatprep.subr.mxu0 0.0
    %226 = vmatpush2.msra.mxu0 0.0
    %227 = vmatprep.subr.mxu0 0.0
    %228 = vmatpush2.msra.mxu0 0.0
    %229 = vmatprep.subr.mxu0 0.0
    %230 = vmatpush2.msra.mxu0 0.0
    %231 = vmatprep.subr.mxu0 0.0
    %232 = vmatpush2.msra.mxu0 0.0
    %233 = vmatprep.subr.mxu0 0.0
    %234 = vmatpush2.msra.mxu0 0.0
    %235 = vmatprep.subr.mxu0 0.0
    %236 = vmatpush2.msra.mxu0 0.0
    %237 = vmatprep.subr.mxu0 0.0
    %238 = vmatpush2.msra.mxu0 0.0
    %239 = vmatprep.subr.mxu0 0.0
    %240 = vmatpush2.msra.mxu0 0.0
    %241 = vmatprep.subr.mxu0 0.0
    %242 = vmatpush2.msra.mxu0 0.0
    %243 = vmatprep.subr.mxu0 0.0
    %244 = vmatpush2.msra.mxu0 0.0
    %245 = vmatprep.subr.mxu0 0.0
    %246 = vmatpush2.msra.mxu0 0.0
    %247 = vmatprep.subr.mxu0 0.0
    %248 = vmatpush2.msra.mxu0 0.0
    %249 = vmatprep.subr.mxu0 0.0
    %250 = vmatpush2.msra.mxu0 0.0
    %251 = vmatprep.subr.mxu0 0.0
    %252 = vmatpush2.msra.mxu0 0.0
    %253 = vmatprep.subr.mxu0 0.0
    %254 = vmatpush2.msra.mxu0 0.0
    %255 = vmatprep.subr.mxu0 0.0
    %256 = vmatpush2.msra.mxu0 0.0
    %257 = vmatprep.mubr.f32.mxu0 0.0
    %258 = vmatmul.mubr.f32.gmra.mxu0 %v168
    %v259 = vpop.f32.mrf.mxu0
    %v260 = vadd.f32 %v191, %v259
    %v261 = vpop.f32.mrf.mxu0
    %262 = vmatprep.mubr.f32.mxu0 0.0
    %263 = vmatmul.mubr.f32.gmra.mxu0 %v169
    %v264 = vpop.f32.mrf.mxu0
    %v265 = vadd.f32 %v191, %v264
    %v266 = vpop.f32.mrf.mxu0
    %267 = vdwg.mxu0
    %268 = vst.msk [vmem:[#allocation2] sm:$0xff] %vm34, %v260
    %269 = vst.msk [vmem:[#allocation2 + $0x8] sm:$0xff] %vm34, %v265
    // Predicated region
    $region22: #{tpu_custom_call.1} parent=1 // pred_check
      _
    $region23: #{tpu_custom_call.1} parent=1 // pred_check_branch
      %271 = sbr.rel (0) target = $region25
    $region24: #{tpu_custom_call.1} parent=1 // pred_region
      %s273 = ssub.s32 256, 256
      %274 = vsyncadd [#allocation3], %s273
      %s275 = sshll.u32 [#allocation2], 4
      %s276 = int_to_ptr.vmem [resolvable:$true] %s275
      %281 = dma.vmem_to_hbm [thread:$0]  %s276, 256, %s5, [#allocation3], 128, 128, 8
    $region25: #{tpu_custom_call.1} parent=1 // pred_fallthru
      _
    // Predicated region
    $region26: #{tpu_custom_call.1} parent=1 // pred_check
      _
    $region27: #{tpu_custom_call.1} parent=1 // pred_check_branch
      %283 = sbr.rel (0) target = $region29
    $region28: #{tpu_custom_call.1} parent=1 // pred_region
      %284 = dma.done [#allocation3], 256
    $region29: #{tpu_custom_call.1} parent=1 // pred_fallthru
      _
    %285 = vsyncpa [#allocation3], 1

</llo_original>
